<compile_context>
chip_gen: v5e
topology: v5e:2x2
jax: 0.10.0
libtpu: 0.0.40
codegen_flags: <defaults>
</compile_context>

<pallas_src>
import jax
import jax.numpy as jnp
from jax.experimental import pallas as pl
from jax.experimental.pallas import tpu as pltpu


def _round_up(v, m):
    return ((v + m - 1) // m) * m


_LANE = 128          # output lane width
_K_TILE = 512        # contraction tile when K-tiling kicks in
_K_FULL_MAX = 2048   # up to this embedding dim, keep the full contraction in one block


# --------------------------- kernels ---------------------------

def _fcn_kernel_fullk(x_ref, w_ref, b_ref, o_ref):
    # One MXU matmul per (tm, tn) output tile, f32 accumulation, broadcast bias add.
    acc = jnp.dot(x_ref[...], w_ref[...], preferred_element_type=jnp.float32)
    o_ref[...] = (acc + b_ref[...].astype(jnp.float32)).astype(o_ref.dtype)


def _fcn_kernel_ktiled(x_ref, w_ref, b_ref, o_ref, acc_ref):
    # Reduction over the K grid axis with a persistent f32 VMEM accumulator.
    k = pl.program_id(2)

    @pl.when(k == 0)
    def _():
        acc_ref[...] = jnp.zeros_like(acc_ref)

    acc_ref[...] += jnp.dot(x_ref[...], w_ref[...],
                            preferred_element_type=jnp.float32)

    @pl.when(k == pl.num_programs(2) - 1)
    def _():
        o_ref[...] = (acc_ref[...] + b_ref[...].astype(jnp.float32)).astype(o_ref.dtype)


# --------------------------- wrapper ---------------------------

def prepare_fcn_params(weight, bias):
    """One-time parameter prep (hoisted out of the per-call path).

    weight: (C, D) PyTorch nn.Linear layout -> (Dp, Cp) lane-dense, K-padded
    bias:   (C,)                            -> (1, Cp)
    Cp = round_up(C, 128).  Dp = D, or round_up(D, _K_TILE) when the K axis
    will be tiled (zero-padded K rows contribute nothing to the matmul).
    """
    C, D = weight.shape
    Cp = _round_up(C, _LANE)
    Dp = D if D <= _K_FULL_MAX else _round_up(D, _K_TILE)
    w_t = jnp.zeros((Dp, Cp), weight.dtype).at[:D, :C].set(weight.T)
    b_row = jnp.zeros((1, Cp), bias.dtype).at[:, :C].set(bias)
    return w_t, b_row


def _fcn_forward_impl(x, w_t, b_row, *, num_classes):
    """x: (B, D); w_t: (Dp, Cp) lane-dense; b_row: (1, Cp). Returns (B, num_classes)."""
    B, D = x.shape
    Dp, Cp = w_t.shape
    assert Dp >= D and Cp % _LANE == 0

    # M tile: sublane-aligned (multiple of 8), capped at 256 rows per block.
    tm = min(_round_up(B, 8), 256)
    Bp = _round_up(B, tm)
    # N tile: lane-dense multiple of 128, capped at 512 lanes per block.
    tn = 512 if Cp % 512 == 0 else (256 if Cp % 256 == 0 else 128)
    tn = min(tn, Cp)

    # Pad batch (and K, if the params were K-padded) with zeros.
    if Bp != B or Dp != D:
        xp = jnp.zeros((Bp, Dp), x.dtype).at[:B, :D].set(x)
    else:
        xp = x

    compiler_params = pltpu.CompilerParams(
        dimension_semantics=("parallel", "parallel")
        if Dp <= _K_FULL_MAX
        else ("parallel", "parallel", "arbitrary"),
        vmem_limit_bytes=32 * 1024 * 1024,
    )

    if Dp <= _K_FULL_MAX:
        # Whole contraction in one block: single MXU matmul per output tile.
        grid_spec = pltpu.PrefetchScalarGridSpec(
            num_scalar_prefetch=0,
            grid=(Bp // tm, Cp // tn),
            in_specs=[
                pl.BlockSpec((tm, Dp), lambda i, j: (i, 0)),   # x tile (full K)
                pl.BlockSpec((Dp, tn), lambda i, j: (0, j)),   # weight tile (full K)
                pl.BlockSpec((1, tn), lambda i, j: (0, j)),    # bias tile
            ],
            out_specs=pl.BlockSpec((tm, tn), lambda i, j: (i, j)),
        )
        kernel = _fcn_kernel_fullk
    else:
        # Large embedding dim: tile K and accumulate in f32 VMEM scratch.
        tk = _K_TILE
        grid_spec = pltpu.PrefetchScalarGridSpec(
            num_scalar_prefetch=0,
            grid=(Bp // tm, Cp // tn, Dp // tk),
            in_specs=[
                pl.BlockSpec((tm, tk), lambda i, j, k: (i, k)),  # x tile
                pl.BlockSpec((tk, tn), lambda i, j, k: (k, j)),  # weight tile
                pl.BlockSpec((1, tn), lambda i, j, k: (0, j)),   # bias tile
            ],
            out_specs=pl.BlockSpec((tm, tn), lambda i, j, k: (i, j)),
            scratch_shapes=[pltpu.VMEM((tm, tn), jnp.float32)],
        )
        kernel = _fcn_kernel_ktiled

    out = pl.pallas_call(
        kernel,
        out_shape=jax.ShapeDtypeStruct((Bp, Cp), x.dtype),
        grid_spec=grid_spec,
        compiler_params=compiler_params,
    )(xp, w_t, b_row)

    return out[:B, :num_classes]


fcn_forward = jax.jit(_fcn_forward_impl, static_argnames=("num_classes",))


if __name__ == "__main__":
    key = jax.random.PRNGKey(0)
    kx, kw, kb, kx2, kw2, kb2, kx3, kw3, kb3 = jax.random.split(key, 9)

    # Module-implied small shapes: batch=2, global_embedding_dim=32, num_classes=8.
    B, D, C = 2, 32, 8
    x = jax.random.normal(kx, (B, D), dtype=jnp.float32)
    weight = jax.random.normal(kw, (C, D), dtype=jnp.float32) * 0.1  # (C, D) PyTorch layout
    bias = jax.random.normal(kb, (C,), dtype=jnp.float32) * 0.1

    w_t, b_row = prepare_fcn_params(weight, bias)
    out = fcn_forward(x, w_t, b_row, num_classes=C)
    jax.block_until_ready(out)

    ref = x @ weight.T + bias
    assert out.shape == (B, C)
    assert jnp.allclose(out, ref, atol=1e-5, rtol=1e-5)

    # Larger classifier-like shapes: exercises the multi-tile (M, N) grid path.
    B2, D2, C2 = 256, 512, 1000
    x2 = jax.random.normal(kx2, (B2, D2), dtype=jnp.float32)
    weight2 = jax.random.normal(kw2, (C2, D2), dtype=jnp.float32) * 0.02
    bias2 = jax.random.normal(kb2, (C2,), dtype=jnp.float32) * 0.02

    w_t2, b_row2 = prepare_fcn_params(weight2, bias2)
    out2 = fcn_forward(x2, w_t2, b_row2, num_classes=C2)
    jax.block_until_ready(out2)

    ref2 = x2 @ weight2.T + bias2
    assert out2.shape == (B2, C2)
    assert jnp.allclose(out2, ref2, atol=5e-3, rtol=5e-3)

    # Wide-embedding shapes: exercises the K-tiled accumulator path.
    B3, D3, C3 = 64, 4096, 256
    x3 = jax.random.normal(kx3, (B3, D3), dtype=jnp.float32)
    weight3 = jax.random.normal(kw3, (C3, D3), dtype=jnp.float32) * 0.02
    bias3 = jax.random.normal(kb3, (C3,), dtype=jnp.float32) * 0.02

    w_t3, b_row3 = prepare_fcn_params(weight3, bias3)
    out3 = fcn_forward(x3, w_t3, b_row3, num_classes=C3)
    jax.block_until_ready(out3)

    ref3 = jnp.dot(x3, weight3.T, precision=jax.lax.Precision.HIGHEST) + bias3
    assert out3.shape == (B3, C3)
    assert jnp.allclose(out3, ref3, atol=1e-2, rtol=1e-2)

    print("KERNEL_OK")
</pallas_src>

<mosaic_0001>
module attributes {stable_mosaic.version = 11 : i64} {
  func.func @_fcn_kernel_fullk(%arg0: i32, %arg1: i32, %arg2: memref<8x32xf32, #tpu.memory_space<vmem>>, %arg3: memref<32x128xf32, #tpu.memory_space<vmem>>, %arg4: memref<1x128xf32, #tpu.memory_space<vmem>>, %arg5: memref<8x128xf32, #tpu.memory_space<vmem>>) attributes {dimension_semantics = [#tpu.dimension_semantics<parallel>, #tpu.dimension_semantics<parallel>], iteration_bounds = array<i64: 1, 1>, scalar_prefetch = 0 : i64, scratch_operands = 0 : i64, tpu.core_type = #tpu.core_type<tc>, window_params = [{transform_indices = @transform_0, window_bounds = array<i64: 8, 32>}, {transform_indices = @transform_1, window_bounds = array<i64: 32, 128>}, {transform_indices = @transform_2, window_bounds = array<i64: 1, 128>}, {transform_indices = @transform_3, window_bounds = array<i64: 8, 128>}]} {
    %c0 = arith.constant 0 : index
    %c0_0 = arith.constant 0 : index
    %0 = vector.load %arg2[%c0, %c0_0] : memref<8x32xf32, #tpu.memory_space<vmem>>, vector<8x32xf32>
    %c0_1 = arith.constant 0 : index
    %c0_2 = arith.constant 0 : index
    %1 = vector.load %arg3[%c0_1, %c0_2] : memref<32x128xf32, #tpu.memory_space<vmem>>, vector<32x128xf32>
    %cst = arith.constant dense<0.000000e+00> : vector<8x128xf32>
    %2 = tpu.matmul %0, %1, %cst {dimension_numbers = #tpu.dot_dimension_numbers<[1], [0], [0], [1], [0, 0, 1, 1], [], []>} : vector<8x32xf32>, vector<32x128xf32>, vector<8x128xf32> -> vector<8x128xf32>
    %c0_3 = arith.constant 0 : index
    %c0_4 = arith.constant 0 : index
    %3 = vector.load %arg4[%c0_3, %c0_4] : memref<1x128xf32, #tpu.memory_space<vmem>>, vector<1x128xf32>
    %4 = vector.broadcast %3 : vector<1x128xf32> to vector<8x128xf32>
    %5 = arith.addf %2, %4 : vector<8x128xf32>
    %c0_5 = arith.constant 0 : index
    %c0_6 = arith.constant 0 : index
    %6 = vector.load %arg5[%c0_5, %c0_6] : memref<8x128xf32, #tpu.memory_space<vmem>>, vector<8x128xf32>
    tpu.vector_store %arg5[%c0_5, %c0_6], %5 {strides = array<i32>} : memref<8x128xf32, #tpu.memory_space<vmem>>, vector<8x128xf32>,
    return
  }
  func.func @transform_0(%arg0: i32, %arg1: i32) -> (i32, i32) {
    %c0_i32 = arith.constant 0 : i32
    %c0_i32_0 = arith.constant 0 : i32
    return %arg0, %c0_i32 : i32, i32
  }
  func.func @transform_1(%arg0: i32, %arg1: i32) -> (i32, i32) {
    %c0_i32 = arith.constant 0 : i32
    %c0_i32_0 = arith.constant 0 : i32
    return %c0_i32, %arg1 : i32, i32
  }
  func.func @transform_2(%arg0: i32, %arg1: i32) -> (i32, i32) {
    %c0_i32 = arith.constant 0 : i32
    %c0_i32_0 = arith.constant 0 : i32
    return %c0_i32, %arg1 : i32, i32
  }
  func.func @transform_3(%arg0: i32, %arg1: i32) -> (i32, i32) {
    %c0_i32 = arith.constant 0 : i32
    return %arg0, %arg1 : i32, i32
  }
}

</mosaic_0001>

<llo_original>
// kernel: _fcn_forward_impl.1
$region0: #{_fcn_forward_impl.1}
  #allocation0 [shape = 'u32[]', space=smem, size = 0x4, offset = 0x4, fixed_abs, tag = 'smem constant byte address 0x4 - core index']
  #allocation1 [shape = 'u32[72,128]{1,0:T(1,128)}', space=vmem, size = 0x9000, scoped, tag = 'internal scratch']
  %s0 = inlined_call_operand.vmem [shape: f32[8,32], index: 0, kind: input, shape index: {}]
  %s1 = inlined_call_operand.hbm [shape: f32[32,128], index: 1, kind: input, shape index: {}]
  %s2 = inlined_call_operand.vmem [shape: f32[1,128], index: 2, kind: input, shape index: {}]
  %s3 = inlined_call_operand.vmem [shape: f32[8,128], index: 3, kind: output, shape index: {}]
  %s4 = sld [smem:[#allocation0]]
  $region26: #{_fcn_forward_impl.1} parent=0
    _
  %s6 = ssub.s32 1, %s4
  %s7 = scalar_select 0, %s6, %s4
  $region1: #{_fcn_forward_impl.1} parent=0
    #allocation2 [shape = 'u8[16384]{0}', space=vmem, size = 0x4000, scoped, tag = 'input window, operand 1, single buffered']
    #allocation3 [shape = 's32[1]{0}', space=sflag, size = 0x4, scoped, tag = 'scoped memory for _fcn_forward_impl.1']
    %8 = vsyncpa [#allocation3], 0
    // Predicated region
    $region2: #{_fcn_forward_impl.1} parent=1 // pred_check
      _
    $region3: #{_fcn_forward_impl.1} parent=1 // pred_check_branch
      %10 = sbr.rel (0) target = $region5
    $region4: #{_fcn_forward_impl.1} parent=1 // pred_region
      _
    $region5: #{_fcn_forward_impl.1} parent=1 // pred_fallthru
      _
    // Predicated region
    $region6: #{_fcn_forward_impl.1} parent=1 // pred_check
      _
    $region7: #{_fcn_forward_impl.1} parent=1 // pred_check_branch
      %12 = sbr.rel (0) target = $region9
    $region8: #{_fcn_forward_impl.1} parent=1 // pred_region
      %14 = vsyncadd [#allocation3], 0
      %s15 = sshll.u32 %s1, 4
      %s16 = int_to_ptr.hbm [resolvable:$true] %s15
      %s17 = sshll.u32 [#allocation2], 4
      %s18 = int_to_ptr.vmem [resolvable:$true] %s17
      %23 = dma.hbm_to_vmem [thread:$0]  %s16, 512, %s18, [#allocation3], 128, 128, 8
    $region9: #{_fcn_forward_impl.1} parent=1 // pred_fallthru
      _
    // Predicated region
    $region10: #{_fcn_forward_impl.1} parent=1 // pred_check
      _
    $region11: #{_fcn_forward_impl.1} parent=1 // pred_check_branch
      %25 = sbr.rel (0) target = $region13
    $region12: #{_fcn_forward_impl.1} parent=1 // pred_region
      _
    $region13: #{_fcn_forward_impl.1} parent=1 // pred_fallthru
      _
    // Predicated region
    $region14: #{_fcn_forward_impl.1} parent=1 // pred_check
      _
    $region15: #{_fcn_forward_impl.1} parent=1 // pred_check_branch
      %27 = sbr.rel (0) target = $region17
    $region16: #{_fcn_forward_impl.1} parent=1 // pred_region
      %29 = dma.done [#allocation3], 512
    $region17: #{_fcn_forward_impl.1} parent=1 // pred_fallthru
      _
    %v30 = vld [vmem:[%s0] sm:$0xff]
    %v31 = vld [vmem:[#allocation2] sm:$0xff]
    %v32 = vld [vmem:[#allocation2 + $0x8] sm:$0xff]
    %v33 = vld [vmem:[#allocation2 + $0x10] sm:$0xff]
    %v34 = vld [vmem:[#allocation2 + $0x18] sm:$0xff]
    %v35 = vld [vmem:[%s2] sm:$0x1]
    %v37 = vperm.slane %v35, 0
    %vm39 = vcmask 261120
    %v41 = vsel %vm39, %v30, 0
    %43 = vmatpush.msra.mxu0 0.0
    %44 = vmatpush.msra.mxu0 0.0
    %45 = vmatpush.msra.mxu0 0.0
    %46 = vmatpush.msra.mxu0 0.0
    %47 = vmatpush.msra.mxu0 0.0
    %48 = vmatpush.msra.mxu0 0.0
    %49 = vmatpush.msra.mxu0 0.0
    %50 = vmatpush.msra.mxu0 0.0
    %51 = vmatpush.msra.mxu0 0.0
    %52 = vmatpush.msra.mxu0 0.0
    %53 = vmatpush.msra.mxu0 0.0
    %54 = vmatpush.msra.mxu0 0.0
    %55 = vmatpush.msra.mxu0 %v34
    %56 = vmatpush.msra.mxu0 %v33
    %57 = vmatpush.msra.mxu0 %v32
    %58 = vmatpush.msra.mxu0 %v31
    %59 = vmatmul.f32.gmra.mxu0 %v41
    %v60 = vpop.f32.mrf.mxu0
    %v61 = vadd.f32 %v37, %v60
    %62 = vdwg.mxu0
    %63 = vst [vmem:[%s3] sm:$0xff] %v61
    // Predicated region
    $region18: #{_fcn_forward_impl.1} parent=1 // pred_check
      _
    $region19: #{_fcn_forward_impl.1} parent=1 // pred_check_branch
      %65 = sbr.rel (0) target = $region21
    $region20: #{_fcn_forward_impl.1} parent=1 // pred_region
      _
    $region21: #{_fcn_forward_impl.1} parent=1 // pred_fallthru
      _
    // Predicated region
    $region22: #{_fcn_forward_impl.1} parent=1 // pred_check
      _
    $region23: #{_fcn_forward_impl.1} parent=1 // pred_check_branch
      %67 = sbr.rel (0) target = $region25
    $region24: #{_fcn_forward_impl.1} parent=1 // pred_region
      _
    $region25: #{_fcn_forward_impl.1} parent=1 // pred_fallthru
      _
    %68 = vsyncpa [#allocation3], 1

</llo_original>
